<compile_context>
chip_gen: v5e
topology: v5e:2x2
jax: 0.10.0
libtpu: 0.0.40
codegen_flags: <defaults>
</compile_context>

<pallas_src>
import jax
import jax.numpy as jnp
from jax.experimental import pallas as pl
from jax.experimental.pallas import tpu as pltpu


# ----------------------------------------------------------------------------
# Pallas kernel: fused pointwise-MLP (BN folded into W) + ReLU + max over K
# ----------------------------------------------------------------------------
def _make_sa_kernel(num_layers):
    def kernel(g_ref, *refs):
        out_ref = refs[-1]
        prm = refs[:-1]
        K = g_ref.shape[1]
        tile_S = g_ref.shape[2]
        Cin = g_ref.shape[3]
        Cout = out_ref.shape[2]

        # One big (K*tile_S, C) slab per layer: single MXU matmul per layer
        # (weights pushed once, fill/drain amortized over M = K*tile_S rows).
        h = g_ref[0].reshape(K * tile_S, Cin)                 # bf16 slab
        for l in range(num_layers):
            w = prm[2 * l][...]                               # bf16 (ci, co), read in-loop
            b = prm[2 * l + 1][...]                           # f32  (1, co)
            h = jnp.dot(h, w, preferred_element_type=jnp.float32)
            h = jnp.maximum(h + b, 0.0)                       # bias + ReLU once per layer
            if l + 1 < num_layers:
                h = h.astype(jnp.bfloat16)                    # bf16 MXU operand

        # Max over the nsample axis in the epilogue: elementwise VPU max across
        # the K (tile_S, Cout) slabs (leading-dim reshape only, no XLU reduce).
        out_ref[0] = jnp.max(h.reshape(K, tile_S, Cout), axis=0).astype(out_ref.dtype)

    return kernel


def _round_up(x, m):
    return (x + m - 1) // m * m


def sa_mlp_max(grouped_ksc, layer_params, tile_S=None, out_dtype=jnp.float32,
               vmem_limit_bytes=32 * 1024 * 1024):
    """grouped_ksc: (B, K, S, Cin) float; layer_params: [(W (ci,co) f32, b (co,) f32), ...]
    with BatchNorm already folded into W / b.

    Returns (B, S, Cout) = max_k relu(... relu(x_k @ W0 + b0) ... @ WL + bL).
    """
    B, K, S, Cin = grouped_ksc.shape
    num_layers = len(layer_params)
    Cout = layer_params[-1][0].shape[1]

    if tile_S is None:
        # <=128 keeps double-buffered blocks comfortably inside v7x's 64 MiB VMEM
        # and gives the grid multiple parallel steps; multiple of 16 keeps the
        # bf16 input tile sublane-aligned. (On v6e with large S, pass tile_S=256.)
        tile_S = S
        for cand in (128, 64, 32, 16):
            if S % cand == 0:
                tile_S = cand
                break
    assert S % tile_S == 0

    # No channel padding of the grouped input: the block's last dim equals the
    # full (small) Cin -> minimal HBM traffic and no wasted MXU work on zeros.
    g = grouped_ksc.astype(jnp.bfloat16)

    # Lane-dense writeback: pad only the FINAL output channel dim to 128.
    Cout_pad = _round_up(Cout, 128)

    flat = []
    in_specs = [pl.BlockSpec((1, K, tile_S, Cin), lambda b, s: (b, 0, s, 0))]
    for l, (w, bias) in enumerate(layer_params):
        w = w.astype(jnp.float32)
        bias = bias.astype(jnp.float32).reshape(1, -1)
        if l == num_layers - 1 and Cout_pad != Cout:
            w = jnp.pad(w, ((0, 0), (0, Cout_pad - Cout)))
            bias = jnp.pad(bias, ((0, 0), (0, Cout_pad - Cout)))
        w = w.astype(jnp.bfloat16)          # MXU-native operand; bias stays f32
        # Constant block index -> weights/biases stay VMEM-resident across the grid.
        in_specs.append(pl.BlockSpec(w.shape, lambda b, s: (0, 0)))
        in_specs.append(pl.BlockSpec(bias.shape, lambda b, s: (0, 0)))
        flat += [w, bias]

    out_spec = pl.BlockSpec((1, tile_S, Cout_pad), lambda b, s: (b, s, 0))

    out = pl.pallas_call(
        _make_sa_kernel(num_layers),
        out_shape=jax.ShapeDtypeStruct((B, S, Cout_pad), out_dtype),
        grid_spec=pltpu.PrefetchScalarGridSpec(
            num_scalar_prefetch=0,
            grid=(B, S // tile_S),
            in_specs=in_specs,
            out_specs=out_spec,
        ),
        compiler_params=pltpu.CompilerParams(
            dimension_semantics=("parallel", "parallel"),
            vmem_limit_bytes=vmem_limit_bytes,
        ),
    )(g, *flat)

    if Cout_pad != Cout:
        out = out[:, :, :Cout]
    return out


# ----------------------------------------------------------------------------
# Plain-JAX glue: FPS / ball query / grouping (data-dependent gathers)
# ----------------------------------------------------------------------------
def farthest_point_sample(xyz, npoint):
    """xyz: (B, N, 3) -> idx (B, npoint) int32. Matches CUDA impl (starts at point 0)."""
    B, N, _ = xyz.shape

    def body(i, state):
        idxs, dists, farthest = state
        idxs = idxs.at[:, i].set(farthest)
        centroid = jnp.take_along_axis(xyz, farthest[:, None, None], axis=1)  # (B,1,3)
        d = jnp.sum((xyz - centroid) ** 2, axis=-1)                           # (B,N)
        dists = jnp.minimum(dists, d)
        farthest = jnp.argmax(dists, axis=-1).astype(jnp.int32)
        return idxs, dists, farthest

    idxs = jnp.zeros((B, npoint), jnp.int32)
    dists = jnp.full((B, N), 1e10, jnp.float32)
    farthest = jnp.zeros((B,), jnp.int32)
    idxs, _, _ = jax.lax.fori_loop(0, npoint, body, (idxs, dists, farthest))
    return idxs


def ball_query(radius, nsample, xyz, new_xyz):
    """xyz (B,N,3), new_xyz (B,S,3) -> idx (B,S,nsample): first nsample pts inside
    the ball, padded by repeating the first hit (CUDA ball_query semantics)."""
    N = xyz.shape[1]
    d2 = jnp.sum((new_xyz[:, :, None, :] - xyz[:, None, :, :]) ** 2, axis=-1)  # (B,S,N)
    inside = d2 < radius ** 2
    keys = jnp.where(inside, jnp.arange(N)[None, None, :], N)
    idx = jnp.sort(keys, axis=-1)[:, :, :nsample]
    first = idx[:, :, :1]
    idx = jnp.where(idx == N, first, idx)
    idx = jnp.where(idx == N, 0, idx)  # degenerate: no point inside ball (CUDA-like fallback)
    return idx.astype(jnp.int32)


def gather_points(pts, idx):
    """pts (B,N,C), idx (B,...) -> (B,...,C)"""
    return jax.vmap(lambda p, i: p[i])(pts, idx)


# ----------------------------------------------------------------------------
# Module: parameter init (deterministic) + forward
# ----------------------------------------------------------------------------
def init_params(key, in_c, mlp):
    """Conv2d(ci, co, 1) + BatchNorm2d(co) per layer; BN folded (eval mode) into W/b."""
    # TODO(synk): BatchNorm is folded with (synthetic) running stats, i.e. eval-mode
    # semantics; torch training-mode batch statistics would need a cross-batch
    # reduction outside the tiled kernel.
    params = []
    ci = in_c
    eps = 1e-5
    for co in mlp:
        key, k1, k2, k3, k4, k5, k6 = jax.random.split(key, 7)
        w_conv = 0.1 * jax.random.normal(k1, (co, ci, 1, 1), jnp.float32)  # torch layout
        b_conv = 0.1 * jax.random.normal(k2, (co,), jnp.float32)
        gamma = jax.random.uniform(k3, (co,), jnp.float32, 0.5, 1.5)
        beta = 0.1 * jax.random.normal(k4, (co,), jnp.float32)
        r_mean = 0.1 * jax.random.normal(k5, (co,), jnp.float32)
        r_var = jax.random.uniform(k6, (co,), jnp.float32, 0.5, 1.5)

        w_mat = jnp.transpose(w_conv.reshape(co, ci))                      # (ci, co)
        scale = gamma / jnp.sqrt(r_var + eps)                              # (co,)
        w_folded = w_mat * scale[None, :]                                  # BN scale folded into W
        b_folded = (b_conv - r_mean) * scale + beta                        # (co,)
        params.append((w_folded, b_folded))
        ci = co
    return params


def pointnet_set_abstraction(xyz, points, npoint, radius, nsample, layer_params,
                             tile_S=None):
    """xyz (B,N,3), points (B,N,C) or None ->
       (new_xyz (B,npoint,3), new_points (B,npoint,C_out), grouped (B,nsample,npoint,C_in))."""
    fps_idx = farthest_point_sample(xyz, npoint)                     # (B, S)
    new_xyz = gather_points(xyz, fps_idx)                            # (B, S, 3)
    idx = ball_query(radius, nsample, xyz, new_xyz)                  # (B, S, K)
    idx_ks = jnp.transpose(idx, (0, 2, 1))                           # (B, K, S)
    # Build grouped directly in (B, K, S, C) layout so each per-k slab seen by the
    # kernel is a contiguous (tile_S, C) tile and the slab merge is leading-dim only.
    grouped_xyz = gather_points(xyz, idx_ks) - new_xyz[:, None, :, :]    # (B, K, S, 3)
    if points is None:
        grouped = grouped_xyz
    else:
        grouped_pts = gather_points(points, idx_ks)                  # (B, K, S, C)
        grouped = jnp.concatenate([grouped_xyz, grouped_pts], axis=-1)
    grouped = grouped.astype(jnp.float32)
    new_points = sa_mlp_max(grouped, layer_params, tile_S=tile_S)    # (B, S, C_out)
    return new_xyz, new_points, grouped


def reference_mlp_max(grouped_ksc, layer_params):
    """Pure-JAX reference mirroring the kernel's bf16-operand / f32-accumulate numerics.
    grouped_ksc: (B, K, S, Cin)."""
    h = grouped_ksc.astype(jnp.bfloat16)
    out = None
    for (w, b) in layer_params:
        out = jnp.einsum("bksc,cd->bksd", h, w.astype(jnp.bfloat16),
                         preferred_element_type=jnp.float32)
        out = jnp.maximum(out + b[None, None, None, :], 0.0)
        h = out.astype(jnp.bfloat16)
    return jnp.max(out, axis=1)                                      # max over K -> (B,S,Cout)


if __name__ == "__main__":
    key = jax.random.PRNGKey(0)
    k_xyz, k_pts, k_prm = jax.random.split(key, 3)

    B, N, C_pts = 2, 64, 5
    npoint, radius, nsample = 16, 0.5, 8
    mlp = [16, 32]
    in_c = 3 + C_pts

    xyz = jax.random.uniform(k_xyz, (B, N, 3), jnp.float32)
    points = jax.random.normal(k_pts, (B, N, C_pts), jnp.float32)
    layer_params = init_params(k_prm, in_c, mlp)

    new_xyz, new_points, grouped = pointnet_set_abstraction(
        xyz, points, npoint, radius, nsample, layer_params)
    jax.block_until_ready(new_points)
    jax.block_until_ready(new_xyz)

    ref = reference_mlp_max(grouped, layer_params)
    assert new_xyz.shape == (B, npoint, 3)
    assert new_points.shape == (B, npoint, mlp[-1])
    assert jnp.allclose(new_points, ref, atol=1e-3, rtol=1e-3), (
        float(jnp.max(jnp.abs(new_points - ref))))

    print("KERNEL_OK")
</pallas_src>

<mosaic_0001>
module attributes {stable_mosaic.version = 11 : i64} {
  func.func @kernel(%arg0: i32, %arg1: i32, %arg2: memref<1x8x16x8xbf16, #tpu.memory_space<vmem>>, %arg3: memref<8x16xbf16, #tpu.memory_space<vmem>>, %arg4: memref<1x16xf32, #tpu.memory_space<vmem>>, %arg5: memref<16x128xbf16, #tpu.memory_space<vmem>>, %arg6: memref<1x128xf32, #tpu.memory_space<vmem>>, %arg7: memref<1x16x128xf32, #tpu.memory_space<vmem>>) attributes {dimension_semantics = [#tpu.dimension_semantics<parallel>, #tpu.dimension_semantics<parallel>], iteration_bounds = array<i64: 2, 1>, scalar_prefetch = 0 : i64, scratch_operands = 0 : i64, tpu.core_type = #tpu.core_type<tc>, window_params = [{transform_indices = @transform_0, window_bounds = array<i64: 1, 8, 16, 8>}, {pipeline_mode = #tpu.pipeline_mode<synchronous>, transform_indices = @transform_1, window_bounds = array<i64: 8, 16>}, {pipeline_mode = #tpu.pipeline_mode<synchronous>, transform_indices = @transform_2, window_bounds = array<i64: 1, 16>}, {pipeline_mode = #tpu.pipeline_mode<synchronous>, transform_indices = @transform_3, window_bounds = array<i64: 16, 128>}, {pipeline_mode = #tpu.pipeline_mode<synchronous>, transform_indices = @transform_4, window_bounds = array<i64: 1, 128>}, {transform_indices = @transform_5, window_bounds = array<i64: 1, 16, 128>}]} {
    %c0 = arith.constant 0 : index
    %c0_0 = arith.constant 0 : index
    %c0_1 = arith.constant 0 : index
    %c0_2 = arith.constant 0 : index
    %0 = vector.load %arg2[%c0, %c0_0, %c0_1, %c0_2] : memref<1x8x16x8xbf16, #tpu.memory_space<vmem>>, vector<1x8x16x8xbf16>
    %1 = vector.shape_cast %0 : vector<1x8x16x8xbf16> to vector<8x16x8xbf16>
    %2 = vector.shape_cast %1 : vector<8x16x8xbf16> to vector<128x8xbf16>
    %c0_3 = arith.constant 0 : index
    %c0_4 = arith.constant 0 : index
    %3 = vector.load %arg3[%c0_3, %c0_4] : memref<8x16xbf16, #tpu.memory_space<vmem>>, vector<8x16xbf16>
    %c0_5 = arith.constant 0 : index
    %c0_6 = arith.constant 0 : index
    %4 = vector.load %arg4[%c0_5, %c0_6] : memref<1x16xf32, #tpu.memory_space<vmem>>, vector<1x16xf32>
    %cst = arith.constant dense<0.000000e+00> : vector<128x16xf32>
    %5 = tpu.matmul %2, %3, %cst {dimension_numbers = #tpu.dot_dimension_numbers<[1], [0], [0], [1], [0, 0, 1, 1], [], []>} : vector<128x8xbf16>, vector<8x16xbf16>, vector<128x16xf32> -> vector<128x16xf32>
    %6 = vector.broadcast %4 : vector<1x16xf32> to vector<128x16xf32>
    %7 = arith.addf %5, %6 : vector<128x16xf32>
    %cst_7 = arith.constant 0.000000e+00 : f32
    %8 = vector.broadcast %cst_7 : f32 to vector<128x16xf32>
    %9 = arith.maximumf %7, %8 : vector<128x16xf32>
    %10 = arith.truncf %9 : vector<128x16xf32> to vector<128x16xbf16>
    %c0_8 = arith.constant 0 : index
    %c0_9 = arith.constant 0 : index
    %11 = vector.load %arg5[%c0_8, %c0_9] : memref<16x128xbf16, #tpu.memory_space<vmem>>, vector<16x128xbf16>
    %c0_10 = arith.constant 0 : index
    %c0_11 = arith.constant 0 : index
    %12 = vector.load %arg6[%c0_10, %c0_11] : memref<1x128xf32, #tpu.memory_space<vmem>>, vector<1x128xf32>
    %cst_12 = arith.constant dense<0.000000e+00> : vector<128x128xf32>
    %13 = tpu.matmul %10, %11, %cst_12 {dimension_numbers = #tpu.dot_dimension_numbers<[1], [0], [0], [1], [0, 0, 1, 1], [], []>} : vector<128x16xbf16>, vector<16x128xbf16>, vector<128x128xf32> -> vector<128x128xf32>
    %14 = vector.broadcast %12 : vector<1x128xf32> to vector<128x128xf32>
    %15 = arith.addf %13, %14 : vector<128x128xf32>
    %cst_13 = arith.constant 0.000000e+00 : f32
    %16 = vector.broadcast %cst_13 : f32 to vector<128x128xf32>
    %17 = arith.maximumf %15, %16 : vector<128x128xf32>
    %18 = vector.shape_cast %17 : vector<128x128xf32> to vector<8x16x128xf32>
    %cst_14 = arith.constant dense<0xFF800000> : vector<16x128xf32>
    %19 = vector.multi_reduction <maximumf>, %18, %cst_14 [0] : vector<8x16x128xf32> to vector<16x128xf32>
    %c0_15 = arith.constant 0 : index
    %c0_16 = arith.constant 0 : index
    %c0_17 = arith.constant 0 : index
    %20 = vector.load %arg7[%c0_15, %c0_16, %c0_17] : memref<1x16x128xf32, #tpu.memory_space<vmem>>, vector<1x16x128xf32>
    %21 = vector.shape_cast %20 : vector<1x16x128xf32> to vector<16x128xf32>
    %22 = vector.shape_cast %19 : vector<16x128xf32> to vector<1x16x128xf32>
    tpu.vector_store %arg7[%c0_15, %c0_16, %c0_17], %22 {strides = array<i32>} : memref<1x16x128xf32, #tpu.memory_space<vmem>>, vector<1x16x128xf32>,
    return
  }
  func.func @transform_0(%arg0: i32, %arg1: i32) -> (i32, i32, i32, i32) {
    %c0_i32 = arith.constant 0 : i32
    %c0_i32_0 = arith.constant 0 : i32
    %c0_i32_1 = arith.constant 0 : i32
    return %arg0, %c0_i32, %arg1, %c0_i32_0 : i32, i32, i32, i32
  }
  func.func @transform_1(%arg0: i32, %arg1: i32) -> (i32, i32) {
    %c0_i32 = arith.constant 0 : i32
    %c0_i32_0 = arith.constant 0 : i32
    %c0_i32_1 = arith.constant 0 : i32
    return %c0_i32, %c0_i32_0 : i32, i32
  }
  func.func @transform_2(%arg0: i32, %arg1: i32) -> (i32, i32) {
    %c0_i32 = arith.constant 0 : i32
    %c0_i32_0 = arith.constant 0 : i32
    %c0_i32_1 = arith.constant 0 : i32
    return %c0_i32, %c0_i32_0 : i32, i32
  }
  func.func @transform_3(%arg0: i32, %arg1: i32) -> (i32, i32) {
    %c0_i32 = arith.constant 0 : i32
    %c0_i32_0 = arith.constant 0 : i32
    %c0_i32_1 = arith.constant 0 : i32
    return %c0_i32, %c0_i32_0 : i32, i32
  }
  func.func @transform_4(%arg0: i32, %arg1: i32) -> (i32, i32) {
    %c0_i32 = arith.constant 0 : i32
    %c0_i32_0 = arith.constant 0 : i32
    %c0_i32_1 = arith.constant 0 : i32
    return %c0_i32, %c0_i32_0 : i32, i32
  }
  func.func @transform_5(%arg0: i32, %arg1: i32) -> (i32, i32, i32) {
    %c0_i32 = arith.constant 0 : i32
    %c0_i32_0 = arith.constant 0 : i32
    return %arg0, %arg1, %c0_i32 : i32, i32, i32
  }
}

</mosaic_0001>

<llo_original>
// kernel: tpu_custom_call.1
$region0: #{tpu_custom_call.1}
  #allocation0 [shape = 'u32[]', space=smem, size = 0x4, offset = 0x4, fixed_abs, tag = 'smem constant byte address 0x4 - core index']
  #allocation1 [shape = 'u32[72,128]{1,0:T(1,128)}', space=vmem, size = 0x9000, scoped, tag = 'internal scratch']
  %s0 = inlined_call_operand.vmem [shape: bf16[2,8,16,8], index: 0, kind: input, shape index: {}]
  %s1 = inlined_call_operand.vmem [shape: bf16[8,16], index: 1, kind: input, shape index: {}]
  %s2 = inlined_call_operand.vmem [shape: f32[1,16], index: 2, kind: input, shape index: {}]
  %s3 = inlined_call_operand.vmem [shape: bf16[16,128], index: 3, kind: input, shape index: {}]
  %s4 = inlined_call_operand.vmem [shape: f32[1,128], index: 4, kind: input, shape index: {}]
  %s5 = inlined_call_operand.hbm [shape: f32[2,16,128], index: 5, kind: output, shape index: {}]
  %s6 = sld [smem:[#allocation0]]
  $region53: #{tpu_custom_call.1} parent=0
    _
  %s8 = ssub.s32 1, %s6
  %s9 = scalar_select 0, %s8, %s6
  $region1: #{tpu_custom_call.1} parent=0
    #allocation2 [shape = 'u8[16384]{0}', space=vmem, size = 0x4000, scoped, tag = 'output window, operand 0']
    #allocation3 [shape = 's32[2]{0}', space=sflag, size = 0x8, scoped, tag = 'scoped memory for tpu_custom_call.1']
    %10 = vsyncpa [#allocation3], 0
    %s11 = scalar_lea.sflag [#allocation3], 1
    %12 = vsyncpa %s11, 0
    loop: start=0, step=1, limit=4
    $region2: #{tpu_custom_call.1} parent=1 // loop_pre_header
      _
    $region3: #{tpu_custom_call.1} parent=1 // loop_header
      %s14 = sphi 0, %s18
      %p15 = scmp.ge.s32.totalorder %s14, 4
      %s21 = sphi 0, %s33
      %s22 = sphi 0, %s29
      %s23 = sphi 0, %s21
      %s24 = sphi 0, %s22
      %s25 = sphi 0, %s23
      %s26 = sphi 0, %s24
      %s38 = sphi 0, %s40
      %s41 = sphi 0, %s38
      %s42 = sphi 0, %s41
      %s58 = sphi 0, %s42
      %s62 = sphi 0, %s62
      %s64 = sphi 0, %s62
      %s65 = sphi 0, %s64
      %s79 = sphi 0, %s65
      %s83 = sphi 0, %s83
      %s85 = sphi 0, %s83
      %s86 = sphi 0, %s85
      %s100 = sphi 0, %s86
      %s104 = sphi 0, %s104
      %s106 = sphi 0, %s104
      %s107 = sphi 0, %s106
      %s121 = sphi 0, %s107
      %s125 = sphi 0, %s125
      %s127 = sphi 0, %s125
      %s128 = sphi 0, %s127
      %s142 = sphi 0, %s128
      %s150 = sphi 0, %s152
      %s153 = sphi 0, %s150
      %s154 = sphi 0, %s153
      %s170 = sphi 0, %s154
    $region4: #{tpu_custom_call.1} parent=1 // loop_header_branch
      %17 = sbr.rel (%p15) target = $region8
    $region5: #{tpu_custom_call.1} parent=1 // loop_body
      %s19 = ssub.s32 %s14, 1
      %s20 = ssub.s32 %s14, 2
      %s27 = sadd.s32 1, %s22
      %p28 = scmp.ge.s32.totalorder %s27, 1
      %s29 = scalar_select %p28, 0, %s27
      %s30 = sadd.s32 1, %s21
      %s31 = scalar_select %p28, %s30, %s21
      %p32 = scmp.ge.s32.totalorder %s31, 2
      %s33 = scalar_select %p32, 0, %s31
      %s34 = ssub.s32 %s21, %s33
      %s35 = ssub.s32 %s22, %s29
      %s36 = sor.u32 %s34, %s35
      %p37 = scmp.eq.s32.totalorder %s36, 0
      %s39 = sadd.s32 %s38, 1
      %s40 = scalar_select %p37, %s38, %s39
      %p43 = pneg %p37
      %p44 = scmp.eq.s32.totalorder %s14, 1
      %p45 = por %p43, %p44
      %p46 = scmp.ne.s32.totalorder %s38, %s41
      %p47 = scmp.eq.s32.totalorder %s14, 0
      %p48 = por %p46, %p47
      %p49 = scmp.ne.s32.totalorder %s38, %s41
      %p50 = scmp.eq.s32.totalorder %s19, 1
      %p51 = por %p49, %p50
      %p52 = scmp.ne.s32.totalorder %s41, %s42
      %p53 = scmp.eq.s32.totalorder %s19, 0
      %p54 = por %p52, %p53
      %p55 = scmp.ne.s32.totalorder %s41, %s42
      %p56 = scmp.eq.s32.totalorder %s20, 1
      %p57 = por %p55, %p56
      %p59 = scmp.ne.s32.totalorder %s42, %s58
      %p60 = scmp.eq.s32.totalorder %s20, 0
      %p61 = por %p59, %p60
      %s63 = sadd.s32 %s62, 1
      %p66 = scmp.eq.s32.totalorder %s14, 1
      %p67 = scmp.ne.s32.totalorder %s62, %s64
      %p68 = scmp.eq.s32.totalorder %s14, 0
      %p69 = por %p67, %p68
      %p70 = scmp.ne.s32.totalorder %s62, %s64
      %p71 = scmp.eq.s32.totalorder %s19, 1
      %p72 = por %p70, %p71
      %p73 = scmp.ne.s32.totalorder %s64, %s65
      %p74 = scmp.eq.s32.totalorder %s19, 0
      %p75 = por %p73, %p74
      %p76 = scmp.ne.s32.totalorder %s64, %s65
      %p77 = scmp.eq.s32.totalorder %s20, 1
      %p78 = por %p76, %p77
      %p80 = scmp.ne.s32.totalorder %s65, %s79
      %p81 = scmp.eq.s32.totalorder %s20, 0
      %p82 = por %p80, %p81
      %s84 = sadd.s32 %s83, 1
      %p87 = scmp.eq.s32.totalorder %s14, 1
      %p88 = scmp.ne.s32.totalorder %s83, %s85
      %p89 = scmp.eq.s32.totalorder %s14, 0
      %p90 = por %p88, %p89
      %p91 = scmp.ne.s32.totalorder %s83, %s85
      %p92 = scmp.eq.s32.totalorder %s19, 1
      %p93 = por %p91, %p92
      %p94 = scmp.ne.s32.totalorder %s85, %s86
      %p95 = scmp.eq.s32.totalorder %s19, 0
      %p96 = por %p94, %p95
      %p97 = scmp.ne.s32.totalorder %s85, %s86
      %p98 = scmp.eq.s32.totalorder %s20, 1
      %p99 = por %p97, %p98
      %p101 = scmp.ne.s32.totalorder %s86, %s100
      %p102 = scmp.eq.s32.totalorder %s20, 0
      %p103 = por %p101, %p102
      %s105 = sadd.s32 %s104, 1
      %p108 = scmp.eq.s32.totalorder %s14, 1
      %p109 = scmp.ne.s32.totalorder %s104, %s106
      %p110 = scmp.eq.s32.totalorder %s14, 0
      %p111 = por %p109, %p110
      %p112 = scmp.ne.s32.totalorder %s104, %s106
      %p113 = scmp.eq.s32.totalorder %s19, 1
      %p114 = por %p112, %p113
      %p115 = scmp.ne.s32.totalorder %s106, %s107
      %p116 = scmp.eq.s32.totalorder %s19, 0
      %p117 = por %p115, %p116
      %p118 = scmp.ne.s32.totalorder %s106, %s107
      %p119 = scmp.eq.s32.totalorder %s20, 1
      %p120 = por %p118, %p119
      %p122 = scmp.ne.s32.totalorder %s107, %s121
      %p123 = scmp.eq.s32.totalorder %s20, 0
      %p124 = por %p122, %p123
      %s126 = sadd.s32 %s125, 1
      %p129 = scmp.eq.s32.totalorder %s14, 1
      %p130 = scmp.ne.s32.totalorder %s125, %s127
      %p131 = scmp.eq.s32.totalorder %s14, 0
      %p132 = por %p130, %p131
      %p133 = scmp.ne.s32.totalorder %s125, %s127
      %p134 = scmp.eq.s32.totalorder %s19, 1
      %p135 = por %p133, %p134
      %p136 = scmp.ne.s32.totalorder %s127, %s128
      %p137 = scmp.eq.s32.totalorder %s19, 0
      %p138 = por %p136, %p137
      %p139 = scmp.ne.s32.totalorder %s127, %s128
      %p140 = scmp.eq.s32.totalorder %s20, 1
      %p141 = por %p139, %p140
      %p143 = scmp.ne.s32.totalorder %s128, %s142
      %p144 = scmp.eq.s32.totalorder %s20, 0
      %p145 = por %p143, %p144
      %s146 = ssub.s32 %s21, %s33
      %s147 = ssub.s32 %s22, %s29
      %s148 = sor.u32 %s146, %s147
      %p149 = scmp.eq.s32.totalorder %s148, 0
      %s151 = sadd.s32 %s150, 1
      %s152 = scalar_select %p149, %s150, %s151
      %p155 = pneg %p149
      %p156 = scmp.eq.s32.totalorder %s14, 1
      %p157 = por %p155, %p156
      %p158 = scmp.ne.s32.totalorder %s150, %s153
      %p159 = scmp.eq.s32.totalorder %s14, 0
      %p160 = por %p158, %p159
      %p161 = scmp.ne.s32.totalorder %s150, %s153
      %p162 = scmp.eq.s32.totalorder %s19, 1
      %p163 = por %p161, %p162
      %p164 = scmp.ne.s32.totalorder %s153, %s154
      %p165 = scmp.eq.s32.totalorder %s19, 0
      %p166 = por %p164, %p165
      %p167 = scmp.ne.s32.totalorder %s153, %s154
      %p168 = scmp.eq.s32.totalorder %s20, 1
      %p169 = por %p167, %p168
      %p171 = scmp.ne.s32.totalorder %s154, %s170
      %p172 = scmp.eq.s32.totalorder %s20, 0
      %p173 = por %p171, %p172
      %p174 = scmp.le.s32.totalorder 1, %s14
      %p175 = scmp.lt.s32.totalorder %s14, 3
      %p176 = pnand %p174, %p175
      %p177 = pneg %p176
      // Predicated region
      $region9: #{tpu_custom_call.1} parent=5 // pred_check
        _
      $region10: #{tpu_custom_call.1} parent=5 // pred_check_branch
        %179 = sbr.rel (%p176) target = $region12
      $region11: #{tpu_custom_call.1} parent=5 // pred_region
        %s180 = ssub.s32 %s14, 1
        // Predicated region
        $region13: #{tpu_custom_call.1} parent=11 // pred_check
          %p181 = pneg %p75
        $region14: #{tpu_custom_call.1} parent=11 // pred_check_branch
          %183 = sbr.rel (%p181) target = $region16
        $region15: #{tpu_custom_call.1} parent=11 // pred_region
          _
        $region16: #{tpu_custom_call.1} parent=11 // pred_fallthru
          _
        // Predicated region
        $region17: #{tpu_custom_call.1} parent=11 // pred_check
          %p184 = pneg %p96
        $region18: #{tpu_custom_call.1} parent=11 // pred_check_branch
          %186 = sbr.rel (%p184) target = $region20
        $region19: #{tpu_custom_call.1} parent=11 // pred_region
          _
        $region20: #{tpu_custom_call.1} parent=11 // pred_fallthru
          _
        // Predicated region
        $region21: #{tpu_custom_call.1} parent=11 // pred_check
          %p187 = pneg %p117
        $region22: #{tpu_custom_call.1} parent=11 // pred_check_branch
          %189 = sbr.rel (%p187) target = $region24
        $region23: #{tpu_custom_call.1} parent=11 // pred_region
          _
        $region24: #{tpu_custom_call.1} parent=11 // pred_fallthru
          _
        // Predicated region
        $region25: #{tpu_custom_call.1} parent=11 // pred_check
          %p190 = pneg %p138
        $region26: #{tpu_custom_call.1} parent=11 // pred_check_branch
          %192 = sbr.rel (%p190) target = $region28
        $region27: #{tpu_custom_call.1} parent=11 // pred_region
          _
        $region28: #{tpu_custom_call.1} parent=11 // pred_fallthru
          _
      $region12: #{tpu_custom_call.1} parent=5 // pred_fallthru
        _
      %p193 = scmp.lt.s32.totalorder %s14, 2
      // Predicated region
      $region29: #{tpu_custom_call.1} parent=5 // pred_check
        %p194 = pneg %p193
      $region30: #{tpu_custom_call.1} parent=5 // pred_check_branch
        %196 = sbr.rel (%p194) target = $region32
      $region31: #{tpu_custom_call.1} parent=5 // pred_region
        // Predicated region
        $region33: #{tpu_custom_call.1} parent=31 // pred_check
          %p197 = pneg %p48
        $region34: #{tpu_custom_call.1} parent=31 // pred_check_branch
          %199 = sbr.rel (%p197) target = $region36
        $region35: #{tpu_custom_call.1} parent=31 // pred_region
          %s200 = smul.u32 2, %s22
          %p201 = scmp.lt.s32.totalorder %s21, 1
          %s202 = scalar_select %p201, %s21, 1
          %p203 = scmp.lt.s32.totalorder %s200, 1
          %s204 = scalar_select %p203, %s200, 1
          %s205 = smul.addr %s202, 16
          %s206 = sadd.s32 %s204, %s205
          %s207 = smul.addr %s206, 4
          %s208 = scalar_lea.vmem %s0, %s207
          %s209 = smul.u32 2, %s22
        $region36: #{tpu_custom_call.1} parent=31 // pred_fallthru
          _
      $region32: #{tpu_custom_call.1} parent=5 // pred_fallthru
        _
      %p210 = scmp.le.s32.totalorder 1, %s14
      %p211 = scmp.lt.s32.totalorder %s14, 3
      %p212 = pnand %p210, %p211
      %p213 = pneg %p212
      // Predicated region
      $region37: #{tpu_custom_call.1} parent=5 // pred_check
        _
      $region38: #{tpu_custom_call.1} parent=5 // pred_check_branch
        %215 = sbr.rel (%p212) target = $region40
      $region39: #{tpu_custom_call.1} parent=5 // pred_region
        %s216 = ssub.s32 %s14, 1
        %s217 = smul.u32 2, %s24
        %p218 = scmp.lt.s32.totalorder %s23, 1
        %s219 = scalar_select %p218, %s23, 1
        %p220 = scmp.lt.s32.totalorder %s217, 1
        %s221 = scalar_select %p220, %s217, 1
        %s222 = smul.addr %s219, 16
        %s223 = sadd.s32 %s221, %s222
        %s224 = smul.addr %s223, 4
        %s225 = scalar_lea.vmem %s0, %s224
        %p226 = pneg %p54
        %p227 = pneg %p51
        %p228 = pneg %p75
        %p229 = pneg %p72
        %p230 = pneg %p96
        %p231 = pneg %p93
        %p232 = pneg %p117
        %p233 = pneg %p114
        %p234 = pneg %p138
        %p235 = pneg %p135
        %p236 = pneg %p166
        %p237 = pneg %p163
        %s238 = sand.u32 %s153, 1
        %s239 = scalar_lea.sflag [#allocation3], %s238
        %s240 = sand.u32 %s153, 1
        %s241 = smul.addr %s240, 16
        %s242 = scalar_lea.vmem [#allocation2], %s241
        %s243 = smul.u32 2, %s24
        %p244 = scmp.lt.s32.totalorder %s23, 1
        %s245 = scalar_select %p244, %s23, 1
        %p246 = scmp.lt.s32.totalorder %s243, 1
        %s247 = scalar_select %p246, %s243, 1
        %s248 = smul.addr %s245, 16
        %s249 = sadd.s32 %s247, %s248
        %s250 = smul.addr %s249, 4
        %s251 = scalar_lea.vmem %s0, %s250
        %s252 = smul.u32 2, %s24
        %s253 = smul.u32 2, %s24
        %v255 = vld [vmem:[%s251] sm:$0xf]
        %v256 = vld [vmem:[%s251 + $0x4] sm:$0xf]
        %v257 = vld [vmem:[%s251 + $0x8] sm:$0xf]
        %v258 = vld [vmem:[%s251 + $0xc] sm:$0xf]
        %v259 = vld [vmem:[%s251 + $0x10] sm:$0xf]
        %v260 = vld [vmem:[%s251 + $0x14] sm:$0xf]
        %v261 = vld [vmem:[%s251 + $0x18] sm:$0xf]
        %v262 = vld [vmem:[%s251 + $0x1c] sm:$0xf]
        %v263 = vld [vmem:[%s251 + $0x20] sm:$0xf]
        %v264 = vld [vmem:[%s251 + $0x24] sm:$0xf]
        %v265 = vld [vmem:[%s251 + $0x28] sm:$0xf]
        %v266 = vld [vmem:[%s251 + $0x2c] sm:$0xf]
        %v267 = vld [vmem:[%s251 + $0x30] sm:$0xf]
        %v268 = vld [vmem:[%s251 + $0x34] sm:$0xf]
        %v269 = vld [vmem:[%s251 + $0x38] sm:$0xf]
        %v270 = vld [vmem:[%s251 + $0x3c] sm:$0xf]
        %v271 = vld [vmem:[%s1] sm:$0xf]
        %v272 = vld [vmem:[%s2] sm:$0x1]
        %v274 = vperm.slane %v272, 0
        %v292 = vunpack.c.l.b16 %v255
        %v293 = vunpack.c.l.b16 %v256
        %v294 = vunpack.c.l.b16 %v257
        %v295 = vunpack.c.l.b16 %v258
        %v296 = vunpack.c.l.b16 %v259
        %v297 = vunpack.c.l.b16 %v260
        %v298 = vunpack.c.l.b16 %v261
        %v299 = vunpack.c.l.b16 %v262
        %v300 = vunpack.c.l.b16 %v263
        %v301 = vunpack.c.l.b16 %v264
        %v302 = vunpack.c.l.b16 %v265
        %v303 = vunpack.c.l.b16 %v266
        %v304 = vunpack.c.l.b16 %v267
        %v305 = vunpack.c.l.b16 %v268
        %v306 = vunpack.c.l.b16 %v269
        %v307 = vunpack.c.l.b16 %v270
        %v308 = vpack.c.b16 %v293, %v292
        %v309 = vpack.c.b16 %v295, %v294
        %v310 = vpack.c.b16 %v297, %v296
        %v311 = vpack.c.b16 %v299, %v298
        %v312 = vpack.c.b16 %v301, %v300
        %v313 = vpack.c.b16 %v303, %v302
        %v314 = vpack.c.b16 %v305, %v304
        %v315 = vpack.c.b16 %v307, %v306
        %vm316 = vcmask 64512
        %v318 = vsel %vm316, %v308, 0
        %v321 = vsel %vm316, %v309, 0
        %v324 = vsel %vm316, %v310, 0
        %v327 = vsel %vm316, %v311, 0
        %v330 = vsel %vm316, %v312, 0
        %v333 = vsel %vm316, %v313, 0
        %v336 = vsel %vm316, %v314, 0
        %v339 = vsel %vm316, %v315, 0
        %vm341 = vcmask 1043456
        %v343 = vsel %vm341, %v271, 0
        %345 = vmatpush.bf16.msra.mxu0 0
        %346 = vmatpush.bf16.msra.mxu0 0
        %347 = vmatpush.bf16.msra.mxu0 0
        %348 = vmatpush.bf16.msra.mxu0 0
        %349 = vmatpush.bf16.msra.mxu0 0
        %350 = vmatpush.bf16.msra.mxu0 0
        %351 = vmatpush.bf16.msra.mxu0 0
        %352 = vmatpush.bf16.msra.mxu0 %v343
        %353 = vmatmul.bf16.gmra.mxu0 %v318
        %v354 = vpop.f32.mrf.mxu0
        %v355 = vadd.f32 %v274, %v354
        %v356 = vpop.f32.mrf.mxu0
        %v357 = vadd.f32 %v274, %v356
        %358 = vmatmul.bf16.gmra.mxu0 %v321
        %v359 = vpop.f32.mrf.mxu0
        %v360 = vadd.f32 %v274, %v359
        %v361 = vpop.f32.mrf.mxu0
        %v362 = vadd.f32 %v274, %v361
        %363 = vmatmul.bf16.gmra.mxu0 %v324
        %v364 = vpop.f32.mrf.mxu0
        %v365 = vadd.f32 %v274, %v364
        %v366 = vpop.f32.mrf.mxu0
        %v367 = vadd.f32 %v274, %v366
        %368 = vmatmul.bf16.gmra.mxu0 %v327
        %v369 = vpop.f32.mrf.mxu0
        %v370 = vadd.f32 %v274, %v369
        %v371 = vpop.f32.mrf.mxu0
        %v372 = vadd.f32 %v274, %v371
        %373 = vmatmul.bf16.gmra.mxu0 %v330
        %v374 = vpop.f32.mrf.mxu0
        %v375 = vadd.f32 %v274, %v374
        %v376 = vpop.f32.mrf.mxu0
        %v377 = vadd.f32 %v274, %v376
        %378 = vmatmul.bf16.gmra.mxu0 %v333
        %v379 = vpop.f32.mrf.mxu0
        %v380 = vadd.f32 %v274, %v379
        %v381 = vpop.f32.mrf.mxu0
        %v382 = vadd.f32 %v274, %v381
        %383 = vmatmul.bf16.gmra.mxu0 %v336
        %v384 = vpop.f32.mrf.mxu0
        %v385 = vadd.f32 %v274, %v384
        %v386 = vpop.f32.mrf.mxu0
        %v387 = vadd.f32 %v274, %v386
        %388 = vmatmul.bf16.gmra.mxu0 %v339
        %v389 = vpop.f32.mrf.mxu0
        %v390 = vadd.f32 %v274, %v389
        %v391 = vpop.f32.mrf.mxu0
        %v392 = vadd.f32 %v274, %v391
        %393 = vdwg.mxu0
        %v394 = vmax.f32 %v355, 0.0
        %v395 = vmax.f32 %v357, 0.0
        %v396 = vmax.f32 %v360, 0.0
        %v397 = vmax.f32 %v362, 0.0
        %v398 = vmax.f32 %v365, 0.0
        %v399 = vmax.f32 %v367, 0.0
        %v400 = vmax.f32 %v370, 0.0
        %v401 = vmax.f32 %v372, 0.0
        %v402 = vmax.f32 %v375, 0.0
        %v403 = vmax.f32 %v377, 0.0
        %v404 = vmax.f32 %v380, 0.0
        %v405 = vmax.f32 %v382, 0.0
        %v406 = vmax.f32 %v385, 0.0
        %v407 = vmax.f32 %v387, 0.0
        %v408 = vmax.f32 %v390, 0.0
        %v409 = vmax.f32 %v392, 0.0
        %v410 = vpack.c.bf16 %v395, %v394
        %v411 = vpack.c.bf16 %v397, %v396
        %v412 = vpack.c.bf16 %v399, %v398
        %v413 = vpack.c.bf16 %v401, %v400
        %v414 = vpack.c.bf16 %v403, %v402
        %v415 = vpack.c.bf16 %v405, %v404
        %v416 = vpack.c.bf16 %v407, %v406
        %v417 = vpack.c.bf16 %v409, %v408
        %v418 = vld [vmem:[%s3] sm:$0xf]
        %v419 = vld [vmem:[%s3 + $0x4] sm:$0xf]
        %v420 = vld [vmem:[%s4] sm:$0x1]
        %v422 = vperm.slane %v420, 0
        %v426 = vunpack.c.l.b16 %v418
        %v427 = vunpack.c.l.b16 %v419
        %v428 = vpack.c.b16 %v427, %v426
        %vm430 = vcmask 130048
        %v432 = vsel %vm430, %v410, 0
        %v435 = vsel %vm430, %v411, 0
        %v438 = vsel %vm430, %v412, 0
        %v441 = vsel %vm430, %v413, 0
        %v444 = vsel %vm430, %v414, 0
        %v447 = vsel %vm430, %v415, 0
        %v450 = vsel %vm430, %v416, 0
        %v453 = vsel %vm430, %v417, 0
        %455 = vmatpush.bf16.msra.mxu0 0
        %456 = vmatpush.bf16.msra.mxu0 0
        %457 = vmatpush.bf16.msra.mxu0 0
        %458 = vmatpush.bf16.msra.mxu0 0
        %459 = vmatpush.bf16.msra.mxu0 0
        %460 = vmatpush.bf16.msra.mxu0 0
        %461 = vmatpush.bf16.msra.mxu0 0
        %462 = vmatpush.bf16.msra.mxu0 %v428
        %463 = vmatmul.bf16.gmra.mxu0 %v432
        %v464 = vpop.f32.mrf.mxu0
        %v465 = vadd.f32 %v422, %v464
        %v466 = vpop.f32.mrf.mxu0
        %v467 = vadd.f32 %v422, %v466
        %468 = vmatmul.bf16.gmra.mxu0 %v435
        %v469 = vpop.f32.mrf.mxu0
        %v470 = vadd.f32 %v422, %v469
        %v471 = vpop.f32.mrf.mxu0
        %v472 = vadd.f32 %v422, %v471
        %473 = vmatmul.bf16.gmra.mxu0 %v438
        %v474 = vpop.f32.mrf.mxu0
        %v475 = vadd.f32 %v422, %v474
        %v476 = vpop.f32.mrf.mxu0
        %v477 = vadd.f32 %v422, %v476
        %478 = vmatmul.bf16.gmra.mxu0 %v441
        %v479 = vpop.f32.mrf.mxu0
        %v480 = vadd.f32 %v422, %v479
        %v481 = vpop.f32.mrf.mxu0
        %v482 = vadd.f32 %v422, %v481
        %483 = vmatmul.bf16.gmra.mxu0 %v444
        %v484 = vpop.f32.mrf.mxu0
        %v485 = vadd.f32 %v422, %v484
        %v486 = vpop.f32.mrf.mxu0
        %v487 = vadd.f32 %v422, %v486
        %488 = vmatmul.bf16.gmra.mxu0 %v447
        %v489 = vpop.f32.mrf.mxu0
        %v490 = vadd.f32 %v422, %v489
        %v491 = vpop.f32.mrf.mxu0
        %v492 = vadd.f32 %v422, %v491
        %493 = vmatmul.bf16.gmra.mxu0 %v450
        %v494 = vpop.f32.mrf.mxu0
        %v495 = vadd.f32 %v422, %v494
        %v496 = vpop.f32.mrf.mxu0
        %v497 = vadd.f32 %v422, %v496
        %498 = vmatmul.bf16.gmra.mxu0 %v453
        %v499 = vpop.f32.mrf.mxu0
        %v500 = vadd.f32 %v422, %v499
        %v501 = vpop.f32.mrf.mxu0
        %v502 = vadd.f32 %v422, %v501
        %503 = vdwg.mxu0
        %v504 = vmax.f32 %v465, 0.0
        %v505 = vmax.f32 %v467, 0.0
        %v506 = vmax.f32 %v470, 0.0
        %v507 = vmax.f32 %v472, 0.0
        %v508 = vmax.f32 %v475, 0.0
        %v509 = vmax.f32 %v477, 0.0
        %v510 = vmax.f32 %v480, 0.0
        %v511 = vmax.f32 %v482, 0.0
        %v512 = vmax.f32 %v485, 0.0
        %v513 = vmax.f32 %v487, 0.0
        %v514 = vmax.f32 %v490, 0.0
        %v515 = vmax.f32 %v492, 0.0
        %v516 = vmax.f32 %v495, 0.0
        %v517 = vmax.f32 %v497, 0.0
        %v518 = vmax.f32 %v500, 0.0
        %v519 = vmax.f32 %v502, 0.0
        %v520 = vmax.f32 %v504, %v508
        %v521 = vmax.f32 %v506, %v510
        %v522 = vmax.f32 %v520, %v512
        %v523 = vmax.f32 %v521, %v514
        %v524 = vmax.f32 %v522, %v516
        %v525 = vmax.f32 %v523, %v518
        %v526 = vmax.f32 %v524, %v525
        %v527 = vmax.f32 %v505, %v509
        %v528 = vmax.f32 %v507, %v511
        %v529 = vmax.f32 %v527, %v513
        %v530 = vmax.f32 %v528, %v515
        %v531 = vmax.f32 %v529, %v517
        %v532 = vmax.f32 %v530, %v519
        %v533 = vmax.f32 %v531, %v532
        %534 = vst [vmem:[%s242] sm:$0xff] %v526
        %535 = vst [vmem:[%s242 + $0x8] sm:$0xff] %v533
        %s536 = sand.u32 %s153, 1
        %s537 = scalar_lea.sflag [#allocation3], %s536
        %s538 = sand.u32 %s153, 1
        %s539 = smul.addr %s538, 16
        %s540 = scalar_lea.vmem [#allocation2], %s539
        // Predicated region
        $region41: #{tpu_custom_call.1} parent=39 // pred_check
          %p541 = pneg %p163
        $region42: #{tpu_custom_call.1} parent=39 // pred_check_branch
          %543 = sbr.rel (%p541) target = $region44
        $region43: #{tpu_custom_call.1} parent=39 // pred_region
          %s544 = smul.u32 2, %s24
          %546 = vsyncadd %s537, 0
          %s547 = smul.addr %s23, 2
          %s548 = sadd.s32 %s544, %s547
          %s549 = smul.addr %s548, 8
          %s550 = scalar_lea.hbm %s5, %s549
          %s551 = sshll.u32 %s540, 4
          %s552 = int_to_ptr.vmem [resolvable:$true] %s551
          %s553 = sshll.u32 %s550, 4
          %s554 = int_to_ptr.hbm [resolvable:$true] %s553
          %559 = dma.vmem_to_hbm [thread:$0]  %s552, 256, %s554, %s537, 128, 128, 8
        $region44: #{tpu_custom_call.1} parent=39 // pred_fallthru
          _
      $region40: #{tpu_custom_call.1} parent=5 // pred_fallthru
        _
      %p560 = scmp.le.s32.totalorder 2, %s14
      // Predicated region
      $region45: #{tpu_custom_call.1} parent=5 // pred_check
        %p561 = pneg %p560
      $region46: #{tpu_custom_call.1} parent=5 // pred_check_branch
        %563 = sbr.rel (%p561) target = $region48
      $region47: #{tpu_custom_call.1} parent=5 // pred_region
        %s564 = ssub.s32 %s14, 2
        // Predicated region
        $region49: #{tpu_custom_call.1} parent=47 // pred_check
          %p565 = pneg %p169
        $region50: #{tpu_custom_call.1} parent=47 // pred_check_branch
          %567 = sbr.rel (%p565) target = $region52
        $region51: #{tpu_custom_call.1} parent=47 // pred_region
          %s568 = sand.u32 %s154, 1
          %s569 = scalar_lea.sflag [#allocation3], %s568
          %s570 = sand.u32 %s154, 1
          %s571 = smul.addr %s570, 16
          %s572 = scalar_lea.vmem [#allocation2], %s571
          %574 = dma.done %s569, 256
        $region52: #{tpu_custom_call.1} parent=47 // pred_fallthru
          _
      $region48: #{tpu_custom_call.1} parent=5 // pred_fallthru
        _
    $region6: #{tpu_custom_call.1} parent=1 // loop_footer
      %s18 = sadd.s32 1, %s14
    $region7: #{tpu_custom_call.1} parent=1 // loop_footer_branch
      %13 = sbr.rel target = $region3
    $region8: #{tpu_custom_call.1} parent=1 // loop_exit
      _
    %575 = vsyncpa [#allocation3], 1
    %s576 = scalar_lea.sflag [#allocation3], 1
    %577 = vsyncpa %s576, 1

</llo_original>
